<compile_context>
chip_gen: v5e
topology: v5e:2x2
jax: 0.10.0
libtpu: 0.0.40
codegen_flags: <defaults>
</compile_context>

<pallas_src>
import functools

import jax
import jax.numpy as jnp
from jax.experimental import pallas as pl
from jax.experimental.pallas import tpu as pltpu

_LANES = 128
_TARGET_BLOCK_BYTES = 4 * 1024 * 1024   # ~4 MiB per block
_VMEM_LIMIT_BYTES = 32 * 1024 * 1024    # 4 MiB x 4 live buffers = 16 MiB << 32 MiB


def _relu_kernel(x_ref, o_ref):
    # Elementwise hot path on the VPU: max(x, 0) in the input dtype.
    o_ref[...] = jnp.maximum(x_ref[...], jnp.zeros((), x_ref.dtype))


def _sublane_multiple(dtype) -> int:
    # f32 -> 8, bf16/f16 -> 16, int8/fp8 -> 32 (sub-32-bit packs along sublanes)
    itemsize = jnp.dtype(dtype).itemsize
    return max(8, 32 // max(itemsize, 1))


def _round_up(a: int, b: int) -> int:
    return (a + b - 1) // b * b


@functools.partial(jax.jit, static_argnames=("inplace",))
def relu_pallas(x: jax.Array, *, inplace: bool = False) -> jax.Array:
    """ReLU via a tiled Pallas TPU kernel. Works for any shape / float dtype.

    inplace=True adds input_output_aliases={0: 0}; only use it when the caller
    donates `x` (otherwise XLA inserts a defensive copy).
    """
    orig_shape = x.shape
    dtype = x.dtype
    total = x.size
    if total == 0:
        return x

    itemsize = jnp.dtype(dtype).itemsize
    sub_mult = _sublane_multiple(dtype)

    # Lane-dense prefix: largest multiple of 128 elements. The (<128)-element
    # tail is handled with a plain jnp.maximum below -- never pad/copy the
    # whole array just to absorb <= 127 elements.
    tail = total % _LANES
    main = total - tail
    if main == 0:
        # Tiny (< 128 elements): a kernel launch is pure overhead.
        return jnp.maximum(x, jnp.zeros((), dtype))

    flat = x.reshape(-1)
    main_flat = flat[:main] if tail else flat
    rows = main // _LANES
    x2d = main_flat.reshape(rows, _LANES)

    # Block rows: ~4 MiB target, rounded to the dtype's sublane multiple, then
    # capped so the grid has >= 2 blocks for mid-sized tensors (feeds both v7x
    # TensorCores; on 1-TC chips the second block still pipelines).
    block_rows = max(sub_mult, _TARGET_BLOCK_BYTES // (_LANES * itemsize))
    block_rows = _round_up(block_rows, sub_mult)
    block_rows = min(block_rows, _round_up(pl.cdiv(rows, 2), sub_mult))
    if rows < sub_mult:
        block_rows = rows  # full-extent block (== array dim, always legal)

    # Partial final block (rows % block_rows != 0) is handled by Pallas: the
    # out-of-range rows of the last block are simply not written back, so no
    # input padding and no output slicing is needed.
    grid = (pl.cdiv(rows, block_rows),)

    out2d = pl.pallas_call(
        _relu_kernel,
        out_shape=jax.ShapeDtypeStruct((rows, _LANES), dtype),
        grid=grid,
        in_specs=[pl.BlockSpec((block_rows, _LANES), lambda i: (i, 0))],
        out_specs=pl.BlockSpec((block_rows, _LANES), lambda i: (i, 0)),
        compiler_params=pltpu.CompilerParams(
            dimension_semantics=("parallel",),
            vmem_limit_bytes=_VMEM_LIMIT_BYTES,
        ),
        cost_estimate=pl.CostEstimate(
            flops=main,
            bytes_accessed=2 * main * itemsize,
            transcendentals=0,
        ),
        input_output_aliases={0: 0} if inplace else {},
    )(x2d)

    out_flat = out2d.reshape(-1)
    if tail:
        tail_out = jnp.maximum(flat[main:], jnp.zeros((), dtype))
        out_flat = jnp.concatenate([out_flat, tail_out])
    return out_flat.reshape(orig_shape)


if __name__ == "__main__":
    key = jax.random.PRNGKey(0)
    k0, k1, k2, k3 = jax.random.split(key, 4)

    # Primary workload: NCHW input matching the PyTorch module's usage.
    x = jax.random.normal(k0, (2, 4, 16, 16), dtype=jnp.float32)
    y_ref = jnp.maximum(x, 0.0)
    y = relu_pallas(x)
    jax.block_until_ready(y)
    assert y.shape == x.shape and y.dtype == x.dtype
    assert jnp.array_equal(y, y_ref), "Pallas ReLU mismatch (f32 NCHW)"

    # Ragged, sub-32-bit dtype: exercises the aligned-prefix + tiny-tail path
    # and a partial final grid block (no full-array pad / slice anymore).
    xr = jax.random.normal(k1, (3, 5, 17, 19), dtype=jnp.bfloat16)
    yr_ref = jnp.maximum(xr, jnp.zeros((), xr.dtype))
    yr = relu_pallas(xr)
    jax.block_until_ready(yr)
    assert yr.shape == xr.shape and yr.dtype == xr.dtype
    assert jnp.array_equal(yr, yr_ref), "Pallas ReLU mismatch (bf16 ragged)"

    # Larger input: exercises the multi-block tiled grid (grid >= 2).
    xl = jax.random.normal(k2, (2, 2048, 256), dtype=jnp.float32)  # 4 MiB
    yl_ref = jnp.maximum(xl, 0.0)
    yl = relu_pallas(xl)
    jax.block_until_ready(yl)
    assert yl.shape == xl.shape and yl.dtype == xl.dtype
    assert jnp.array_equal(yl, yl_ref), "Pallas ReLU mismatch (tiled grid)"

    # Optional in-place variant (input_output_aliases={0: 0}).
    xi = jax.random.normal(k3, (2, 4, 16, 16), dtype=jnp.float32)
    yi_ref = jnp.maximum(xi, 0.0)
    yi = relu_pallas(xi, inplace=True)
    jax.block_until_ready(yi)
    assert jnp.array_equal(yi, yi_ref), "Pallas ReLU mismatch (inplace)"

    print("KERNEL_OK")
</pallas_src>

<mosaic_0001>
module attributes {stable_mosaic.version = 11 : i64} {
  func.func @_relu_kernel(%arg0: i32, %arg1: memref<8x128xf32, #tpu.memory_space<vmem>>, %arg2: memref<8x128xf32, #tpu.memory_space<vmem>>) attributes {dimension_semantics = [#tpu.dimension_semantics<parallel>], iteration_bounds = array<i64: 2>, scalar_prefetch = 0 : i64, scratch_operands = 0 : i64, tpu.core_type = #tpu.core_type<tc>, window_params = [{transform_indices = @transform_0, window_bounds = array<i64: 8, 128>}, {transform_indices = @transform_1, window_bounds = array<i64: 8, 128>}]} {
    %c0 = arith.constant 0 : index
    %c0_0 = arith.constant 0 : index
    %0 = vector.load %arg1[%c0, %c0_0] : memref<8x128xf32, #tpu.memory_space<vmem>>, vector<8x128xf32>
    %cst = arith.constant 0.000000e+00 : f32
    %1 = vector.broadcast %cst : f32 to vector<8x128xf32>
    %2 = arith.maximumf %0, %1 : vector<8x128xf32>
    %c0_1 = arith.constant 0 : index
    %c0_2 = arith.constant 0 : index
    %3 = vector.load %arg2[%c0_1, %c0_2] : memref<8x128xf32, #tpu.memory_space<vmem>>, vector<8x128xf32>
    tpu.vector_store %arg2[%c0_1, %c0_2], %2 {strides = array<i32>} : memref<8x128xf32, #tpu.memory_space<vmem>>, vector<8x128xf32>,
    return
  }
  func.func @transform_0(%arg0: i32) -> (i32, i32) {
    %c0_i32 = arith.constant 0 : i32
    %c0_i32_0 = arith.constant 0 : i32
    return %arg0, %c0_i32 : i32, i32
  }
  func.func @transform_1(%arg0: i32) -> (i32, i32) {
    %c0_i32 = arith.constant 0 : i32
    %c0_i32_0 = arith.constant 0 : i32
    return %arg0, %c0_i32 : i32, i32
  }
}

</mosaic_0001>

<llo_original>
// kernel: relu_pallas.1
$region0: #{relu_pallas.1}
  #allocation0 [shape = 'u32[]', space=smem, size = 0x4, offset = 0x4, fixed_abs, tag = 'smem constant byte address 0x4 - core index']
  #allocation1 [shape = 'u32[72,128]{1,0:T(1,128)}', space=vmem, size = 0x9000, scoped, tag = 'internal scratch']
  %s0 = inlined_call_operand.vmem [shape: f32[16,128], index: 0, kind: input, shape index: {}]
  %s1 = inlined_call_operand.vmem [shape: f32[16,128], index: 1, kind: output, shape index: {}]
  %s2 = sld [smem:[#allocation0]]
  $region37: #{relu_pallas.1} parent=0
    _
  %s4 = ssub.s32 1, %s2
  %s5 = scalar_select 0, %s4, %s2
  loop: start=0, step=1, limit=4
  $region2: #{relu_pallas.1} parent=0 // loop_pre_header
    _
  $region3: #{relu_pallas.1} parent=0 // loop_header
    %s7 = sphi 0, %s11
    %p8 = scmp.ge.s32.totalorder %s7, 4
    %s17 = sphi 0, %s19
    %s20 = sphi 0, %s17
    %s21 = sphi 0, %s20
    %s37 = sphi 0, %s21
    %s43 = sphi 0, %s45
    %s46 = sphi 0, %s43
    %s47 = sphi 0, %s46
    %s63 = sphi 0, %s47
  $region4: #{relu_pallas.1} parent=0 // loop_header_branch
    %10 = sbr.rel (%p8) target = $region8
  $region5: #{relu_pallas.1} parent=0 // loop_body
    %s12 = ssub.s32 %s7, 1
    %s13 = ssub.s32 %s7, 2
    %s14 = sadd.s32 %s7, 1
    %s15 = ssub.s32 %s7, %s14
    %p16 = scmp.eq.s32.totalorder %s15, 0
    %s18 = sadd.s32 %s17, 1
    %s19 = scalar_select %p16, %s17, %s18
    %p22 = pneg %p16
    %p23 = scmp.eq.s32.totalorder %s7, 1
    %p24 = por %p22, %p23
    %p25 = scmp.ne.s32.totalorder %s17, %s20
    %p26 = scmp.eq.s32.totalorder %s7, 0
    %p27 = por %p25, %p26
    %p28 = scmp.ne.s32.totalorder %s17, %s20
    %p29 = scmp.eq.s32.totalorder %s12, 1
    %p30 = por %p28, %p29
    %p31 = scmp.ne.s32.totalorder %s20, %s21
    %p32 = scmp.eq.s32.totalorder %s12, 0
    %p33 = por %p31, %p32
    %p34 = scmp.ne.s32.totalorder %s20, %s21
    %p35 = scmp.eq.s32.totalorder %s13, 1
    %p36 = por %p34, %p35
    %p38 = scmp.ne.s32.totalorder %s21, %s37
    %p39 = scmp.eq.s32.totalorder %s13, 0
    %p40 = por %p38, %p39
    %s41 = ssub.s32 %s7, %s14
    %p42 = scmp.eq.s32.totalorder %s41, 0
    %s44 = sadd.s32 %s43, 1
    %s45 = scalar_select %p42, %s43, %s44
    %p48 = pneg %p42
    %p49 = scmp.eq.s32.totalorder %s7, 1
    %p50 = por %p48, %p49
    %p51 = scmp.ne.s32.totalorder %s43, %s46
    %p52 = scmp.eq.s32.totalorder %s7, 0
    %p53 = por %p51, %p52
    %p54 = scmp.ne.s32.totalorder %s43, %s46
    %p55 = scmp.eq.s32.totalorder %s12, 1
    %p56 = por %p54, %p55
    %p57 = scmp.ne.s32.totalorder %s46, %s47
    %p58 = scmp.eq.s32.totalorder %s12, 0
    %p59 = por %p57, %p58
    %p60 = scmp.ne.s32.totalorder %s46, %s47
    %p61 = scmp.eq.s32.totalorder %s13, 1
    %p62 = por %p60, %p61
    %p64 = scmp.ne.s32.totalorder %s47, %s63
    %p65 = scmp.eq.s32.totalorder %s13, 0
    %p66 = por %p64, %p65
    %p67 = scmp.le.s32.totalorder 1, %s7
    %p68 = scmp.lt.s32.totalorder %s7, 3
    %p69 = pnand %p67, %p68
    %p70 = pneg %p69
    // Predicated region
    $region9: #{relu_pallas.1} parent=5 // pred_check
      _
    $region10: #{relu_pallas.1} parent=5 // pred_check_branch
      %72 = sbr.rel (%p69) target = $region12
    $region11: #{relu_pallas.1} parent=5 // pred_region
      %s73 = ssub.s32 %s7, 1
    $region12: #{relu_pallas.1} parent=5 // pred_fallthru
      _
    %p74 = scmp.lt.s32.totalorder %s7, 2
    // Predicated region
    $region13: #{relu_pallas.1} parent=5 // pred_check
      %p75 = pneg %p74
    $region14: #{relu_pallas.1} parent=5 // pred_check_branch
      %77 = sbr.rel (%p75) target = $region16
    $region15: #{relu_pallas.1} parent=5 // pred_region
      // Predicated region
      $region17: #{relu_pallas.1} parent=15 // pred_check
        %p78 = pneg %p27
      $region18: #{relu_pallas.1} parent=15 // pred_check_branch
        %80 = sbr.rel (%p78) target = $region20
      $region19: #{relu_pallas.1} parent=15 // pred_region
        %p81 = scmp.lt.s32.totalorder %s7, 1
        %s82 = scalar_select %p81, %s7, 1
        %s83 = smul.addr %s82, 8
        %s84 = scalar_lea.vmem %s0, %s83
      $region20: #{relu_pallas.1} parent=15 // pred_fallthru
        _
    $region16: #{relu_pallas.1} parent=5 // pred_fallthru
      _
    %p85 = scmp.le.s32.totalorder 1, %s7
    %p86 = scmp.lt.s32.totalorder %s7, 3
    %p87 = pnand %p85, %p86
    %p88 = pneg %p87
    // Predicated region
    $region21: #{relu_pallas.1} parent=5 // pred_check
      _
    $region22: #{relu_pallas.1} parent=5 // pred_check_branch
      %90 = sbr.rel (%p87) target = $region24
    $region23: #{relu_pallas.1} parent=5 // pred_region
      %s91 = ssub.s32 %s7, 1
      %p92 = scmp.lt.s32.totalorder %s12, 1
      %s93 = scalar_select %p92, %s12, 1
      %s94 = smul.addr %s93, 8
      %s95 = scalar_lea.vmem %s0, %s94
      %p96 = pneg %p33
      %p97 = pneg %p30
      %p98 = pneg %p59
      %p99 = pneg %p56
      %p100 = scmp.lt.s32.totalorder %s12, 1
      %s101 = scalar_select %p100, %s12, 1
      %s102 = smul.addr %s101, 8
      %s103 = scalar_lea.vmem %s1, %s102
      %p104 = scmp.lt.s32.totalorder %s12, 1
      %s105 = scalar_select %p104, %s12, 1
      %s106 = smul.addr %s105, 8
      %s107 = scalar_lea.vmem %s0, %s106
      %p108 = scmp.lt.s32.totalorder %s12, 1
      %s109 = scalar_select %p108, %s12, 1
      %s110 = smul.addr %s109, 8
      %s111 = scalar_lea.vmem %s1, %s110
      %v112 = vld [vmem:[%s107] sm:$0xff]
      %v113 = vmax.f32 %v112, 0.0
      %114 = vst [vmem:[%s111] sm:$0xff] %v113
      %p115 = scmp.lt.s32.totalorder %s12, 1
      %s116 = scalar_select %p115, %s12, 1
      %s117 = smul.addr %s116, 8
      %s118 = scalar_lea.vmem %s1, %s117
      // Predicated region
      $region25: #{relu_pallas.1} parent=23 // pred_check
        %p119 = pneg %p56
      $region26: #{relu_pallas.1} parent=23 // pred_check_branch
        %121 = sbr.rel (%p119) target = $region28
      $region27: #{relu_pallas.1} parent=23 // pred_region
        _
      $region28: #{relu_pallas.1} parent=23 // pred_fallthru
        _
    $region24: #{relu_pallas.1} parent=5 // pred_fallthru
      _
    %p122 = scmp.le.s32.totalorder 2, %s7
    // Predicated region
    $region29: #{relu_pallas.1} parent=5 // pred_check
      %p123 = pneg %p122
    $region30: #{relu_pallas.1} parent=5 // pred_check_branch
      %125 = sbr.rel (%p123) target = $region32
    $region31: #{relu_pallas.1} parent=5 // pred_region
      %s126 = ssub.s32 %s7, 2
      // Predicated region
      $region33: #{relu_pallas.1} parent=31 // pred_check
        %p127 = pneg %p62
      $region34: #{relu_pallas.1} parent=31 // pred_check_branch
        %129 = sbr.rel (%p127) target = $region36
      $region35: #{relu_pallas.1} parent=31 // pred_region
        %p130 = scmp.lt.s32.totalorder %s13, 1
        %s131 = scalar_select %p130, %s13, 1
        %s132 = smul.addr %s131, 8
        %s133 = scalar_lea.vmem %s1, %s132
      $region36: #{relu_pallas.1} parent=31 // pred_fallthru
        _
    $region32: #{relu_pallas.1} parent=5 // pred_fallthru
      _
  $region6: #{relu_pallas.1} parent=0 // loop_footer
    %s11 = sadd.s32 1, %s7
  $region7: #{relu_pallas.1} parent=0 // loop_footer_branch
    %6 = sbr.rel target = $region3
  $region8: #{relu_pallas.1} parent=0 // loop_exit
    _

</llo_original>
